<compile_context>
chip_gen: v7x
topology: tpu7x:2x2x1
jax: 0.10.0
libtpu: 0.0.40
codegen_flags: <defaults>
</compile_context>

<pallas_src>
import jax
import jax.numpy as jnp
from jax.experimental import pallas as pl
from jax.experimental.pallas import tpu as pltpu


_VMEM_LIMIT_BYTES = 48 * 1024 * 1024   # > 16/32 MiB scoped defaults, < v7x 64 MiB


def _round_up(x: int, m: int) -> int:
    return ((x + m - 1) // m) * m


def _pick_batch_tile(B: int, fm_in: int, n_pad: int, block_b=None,
                     vmem_budget_bytes: int = 36 << 20) -> int:
    """Pick the batch tile: as large as the VMEM budget allows, capped for v7x."""
    if block_b is None:
        lane_in = _round_up(fm_in, 128)
        # rough f32 footprint per batch row inside the kernel:
        #   2x latent double-buffer (lanes padded to 128)
        # + ~3x (tb, n_pad) matmul result / temporaries
        # + 2x lane-padded (tb, 1) output double-buffer
        per_row_bytes = 4 * (2 * lane_in + 3 * n_pad + 2 * 128)
        block_b = vmem_budget_bytes // per_row_bytes
    tb = max(8, min(int(block_b), 8192))
    tb = (tb // 8) * 8                      # sublane multiple
    if tb >= B:
        return B                            # single block == full array dim
    return tb


def _fm_kernel(x_ref, v_ref, aux_ref, o_ref):
    x = x_ref[...]                                               # (TB, fm_in) f32

    # Single MXU pass; zero-padded lanes of V contribute nothing to the reduce,
    # so no column mask is needed.
    xv = jnp.dot(x, v_ref[...], preferred_element_type=jnp.float32)  # (TB, n_pad)
    quad = 0.5 * jnp.sum(xv * xv, axis=1, keepdims=True)             # 0.5*sum((xV)^2)

    v2half = aux_ref[0:1, :]      # (1, fm_in)  0.5 * rowsum(V*V)
    lin_w = aux_ref[1:2, :]       # (1, fm_in)  Linear weight row

    # -0.5 * sum_k (x^2 @ V^2)  +  x @ lin_w^T, fused into one VPU reduce:
    #   sum_j x_j * (lin_w_j - x_j * 0.5 * sum_k V_jk^2)
    lin_minus_s2 = jnp.sum(x * (lin_w - x * v2half), axis=1, keepdims=True)

    o_ref[...] = quad + lin_minus_s2                                 # (TB, 1)


def fm_layer_with_bias(latent, user_id, item_id, V, lin_w, lin_b,
                       b_user, b_item, *, block_b=None):
    """latent: (B, fm_in) f32; user_id/item_id: (B, 1) int; returns (B, 1) f32."""
    latent = latent.astype(jnp.float32)
    V = V.astype(jnp.float32)
    B, fm_in = latent.shape
    fm_k = V.shape[1]

    # --- pinned weights ----------------------------------------------------
    n_pad = _round_up(fm_k, 128)                          # lane-dense V
    v_pad = jnp.pad(V, ((0, 0), (0, n_pad - fm_k)))        # (fm_in, n_pad)
    v2half = 0.5 * jnp.sum(V * V, axis=1)                  # (fm_in,)
    aux = jnp.stack(
        [v2half, lin_w.reshape(fm_in).astype(jnp.float32)], axis=0)  # (2, fm_in)

    # --- batch tiling (no wrapper-side padding of latent) -------------------
    tb = _pick_batch_tile(B, fm_in, n_pad, block_b)
    grid = (pl.cdiv(B, tb),)

    out = pl.pallas_call(
        _fm_kernel,
        out_shape=jax.ShapeDtypeStruct((B, 1), jnp.float32),
        grid=grid,
        in_specs=[
            pl.BlockSpec((tb, fm_in), lambda i: (i, 0)),     # latent (streamed)
            pl.BlockSpec((fm_in, n_pad), lambda i: (0, 0)),  # V (pinned)
            pl.BlockSpec((2, fm_in), lambda i: (0, 0)),      # [0.5*rowsum(V^2); lin_w]
        ],
        out_specs=pl.BlockSpec((tb, 1), lambda i: (i, 0)),
        compiler_params=pltpu.CompilerParams(
            dimension_semantics=("parallel",),
            vmem_limit_bytes=_VMEM_LIMIT_BYTES),
    )(latent, v_pad, aux)

    # Data-dependent bias gathers + scalar Linear bias: cheap XLA glue,
    # keeps the kernel free of lane-sparse (tb, 1) input streams.
    return (out
            + lin_b.reshape(1, 1).astype(jnp.float32)
            + b_user[user_id].astype(jnp.float32)
            + b_item[item_id].astype(jnp.float32))


def fm_reference(latent, user_id, item_id, V, lin_w, lin_b, b_user, b_item):
    s1_square = jnp.sum(jnp.matmul(latent, V) ** 2, axis=1, keepdims=True)
    s2 = jnp.sum(jnp.matmul(latent ** 2, V ** 2), axis=1, keepdims=True)
    out_inter = 0.5 * (s1_square - s2)
    out_lin = latent @ lin_w.T + lin_b
    predict = out_inter + out_lin
    return predict + b_user[user_id] + b_item[item_id]


if __name__ == "__main__":
    fm_in = 32       # latent factors * 2
    fm_k = 16
    user_count = 10
    item_count = 12

    key = jax.random.PRNGKey(0)
    k_par, k_data = jax.random.split(key)
    k_v, k_w, k_b, k_bu, k_bi = jax.random.split(k_par, 5)

    # parameters (deterministic init; mirrors torch shapes)
    V = jax.random.normal(k_v, (fm_in, fm_k), dtype=jnp.float32)          # torch.randn
    lin_w = jax.random.normal(k_w, (1, fm_in), dtype=jnp.float32) * 0.1   # Linear.weight
    lin_b = jax.random.normal(k_b, (1,), dtype=jnp.float32) * 0.1         # Linear.bias
    # b_user/b_item are zeros in the module; small random values exercise the path.
    b_user = jax.random.normal(k_bu, (user_count,), dtype=jnp.float32) * 0.01
    b_item = jax.random.normal(k_bi, (item_count,), dtype=jnp.float32) * 0.01

    def make_inputs(sub, B):
        k_lat, k_u, k_i = jax.random.split(sub, 3)
        latent = jax.random.normal(k_lat, (B, fm_in), dtype=jnp.float32)
        user_id = jax.random.randint(k_u, (B, 1), 0, user_count, dtype=jnp.int32)
        item_id = jax.random.randint(k_i, (B, 1), 0, item_count, dtype=jnp.int32)
        return latent, user_id, item_id

    def check(sub, B, block_b=None):
        latent, user_id, item_id = make_inputs(sub, B)
        out = fm_layer_with_bias(latent, user_id, item_id, V, lin_w, lin_b,
                                 b_user, b_item, block_b=block_b)
        out = jax.block_until_ready(out)
        ref = fm_reference(latent, user_id, item_id, V, lin_w, lin_b,
                           b_user, b_item)
        assert out.shape == (B, 1)
        assert jnp.allclose(out, ref, atol=1e-3, rtol=1e-3), (B, out, ref)

    sub1, sub2, sub3 = jax.random.split(k_data, 3)
    check(sub1, B=8)                  # single block (auto tile)
    check(sub2, B=24, block_b=8)      # multi-block pipelined grid
    check(sub3, B=13, block_b=8)      # ragged last block, no wrapper padding

    print("KERNEL_OK")
</pallas_src>

<mosaic_0001>
module attributes {stable_mosaic.version = 11 : i64} {
  func.func @_fm_kernel(%arg0: i32, %arg1: memref<8x32xf32, #tpu.memory_space<vmem>>, %arg2: memref<32x128xf32, #tpu.memory_space<vmem>>, %arg3: memref<2x32xf32, #tpu.memory_space<vmem>>, %arg4: memref<8x1xf32, #tpu.memory_space<vmem>>) attributes {dimension_semantics = [#tpu.dimension_semantics<parallel>], iteration_bounds = array<i64: 1>, scalar_prefetch = 0 : i64, scratch_operands = 0 : i64, tpu.core_type = #tpu.core_type<tc>, window_params = [{transform_indices = @transform_0, window_bounds = array<i64: 8, 32>}, {pipeline_mode = #tpu.pipeline_mode<synchronous>, transform_indices = @transform_1, window_bounds = array<i64: 32, 128>}, {pipeline_mode = #tpu.pipeline_mode<synchronous>, transform_indices = @transform_2, window_bounds = array<i64: 2, 32>}, {transform_indices = @transform_3, window_bounds = array<i64: 8, 1>}]} {
    %c0 = arith.constant 0 : index
    %c0_0 = arith.constant 0 : index
    %0 = vector.load %arg1[%c0, %c0_0] : memref<8x32xf32, #tpu.memory_space<vmem>>, vector<8x32xf32>
    %c0_1 = arith.constant 0 : index
    %c0_2 = arith.constant 0 : index
    %1 = vector.load %arg2[%c0_1, %c0_2] : memref<32x128xf32, #tpu.memory_space<vmem>>, vector<32x128xf32>
    %cst = arith.constant dense<0.000000e+00> : vector<8x128xf32>
    %2 = tpu.matmul %0, %1, %cst {dimension_numbers = #tpu.dot_dimension_numbers<[1], [0], [0], [1], [0, 0, 1, 1], [], []>} : vector<8x32xf32>, vector<32x128xf32>, vector<8x128xf32> -> vector<8x128xf32>
    %3 = arith.mulf %2, %2 : vector<8x128xf32>
    %cst_3 = arith.constant dense<0.000000e+00> : vector<8xf32>
    %4 = vector.multi_reduction <add>, %3, %cst_3 [1] : vector<8x128xf32> to vector<8xf32>
    %5 = vector.shape_cast %4 : vector<8xf32> to vector<8x1xf32>
    %cst_4 = arith.constant 5.000000e-01 : f32
    %6 = vector.broadcast %cst_4 : f32 to vector<8x1xf32>
    %7 = arith.mulf %6, %5 : vector<8x1xf32>
    %c0_5 = arith.constant 0 : index
    %c0_6 = arith.constant 0 : index
    %8 = vector.load %arg3[%c0_5, %c0_6] : memref<2x32xf32, #tpu.memory_space<vmem>>, vector<1x32xf32>
    %c1 = arith.constant 1 : index
    %c0_7 = arith.constant 0 : index
    %9 = vector.load %arg3[%c1, %c0_7] : memref<2x32xf32, #tpu.memory_space<vmem>>, vector<1x32xf32>
    %10 = vector.broadcast %8 : vector<1x32xf32> to vector<8x32xf32>
    %11 = arith.mulf %0, %10 : vector<8x32xf32>
    %12 = vector.broadcast %9 : vector<1x32xf32> to vector<8x32xf32>
    %13 = arith.subf %12, %11 : vector<8x32xf32>
    %14 = arith.mulf %0, %13 : vector<8x32xf32>
    %cst_8 = arith.constant dense<0.000000e+00> : vector<8xf32>
    %15 = vector.multi_reduction <add>, %14, %cst_8 [1] : vector<8x32xf32> to vector<8xf32>
    %16 = vector.shape_cast %15 : vector<8xf32> to vector<8x1xf32>
    %17 = arith.addf %7, %16 : vector<8x1xf32>
    %c0_9 = arith.constant 0 : index
    %c0_10 = arith.constant 0 : index
    %18 = vector.load %arg4[%c0_9, %c0_10] : memref<8x1xf32, #tpu.memory_space<vmem>>, vector<8x1xf32>
    tpu.vector_store %arg4[%c0_9, %c0_10], %17 {strides = array<i32>} : memref<8x1xf32, #tpu.memory_space<vmem>>, vector<8x1xf32>,
    return
  }
  func.func @transform_0(%arg0: i32) -> (i32, i32) {
    %c0_i32 = arith.constant 0 : i32
    %c0_i32_0 = arith.constant 0 : i32
    return %arg0, %c0_i32 : i32, i32
  }
  func.func @transform_1(%arg0: i32) -> (i32, i32) {
    %c0_i32 = arith.constant 0 : i32
    %c0_i32_0 = arith.constant 0 : i32
    %c0_i32_1 = arith.constant 0 : i32
    return %c0_i32, %c0_i32_0 : i32, i32
  }
  func.func @transform_2(%arg0: i32) -> (i32, i32) {
    %c0_i32 = arith.constant 0 : i32
    %c0_i32_0 = arith.constant 0 : i32
    %c0_i32_1 = arith.constant 0 : i32
    return %c0_i32, %c0_i32_0 : i32, i32
  }
  func.func @transform_3(%arg0: i32) -> (i32, i32) {
    %c0_i32 = arith.constant 0 : i32
    %c0_i32_0 = arith.constant 0 : i32
    return %arg0, %c0_i32 : i32, i32
  }
}

</mosaic_0001>

<llo_original>
// kernel: tpu_custom_call.1
$region0: #{tpu_custom_call.1}
  #allocation0 [shape = 'u32[]', space=smem, size = 0x4, offset = 0x4, fixed_abs, tag = 'smem constant byte address 0x4 - core index']
  #allocation1 [shape = 'u32[144,128]{1,0:T(1,128)}', space=vmem, size = 0x12000, scoped, tag = 'internal scratch']
  %s0 = inlined_call_operand.hbm [shape: f32[8,32], index: 0, kind: input, shape index: {}]
  %s1 = inlined_call_operand.hbm [shape: f32[32,128], index: 1, kind: input, shape index: {}]
  %s2 = inlined_call_operand.vmem [shape: f32[2,32], index: 2, kind: input, shape index: {}]
  %s3 = inlined_call_operand.vmem [shape: f32[8,1], index: 3, kind: output, shape index: {}]
  %s4 = sld [smem:[#allocation0]]
  $region30: #{tpu_custom_call.1} parent=0
    _
  %s6 = ssub.s32 1, %s4
  %s7 = scalar_select 0, %s6, %s4
  $region1: #{tpu_custom_call.1} parent=0
    #allocation2 [shape = 'u8[4096]{0}', space=vmem, size = 0x1000, scoped, tag = 'input window, operand 0, single buffered']
    #allocation3 [shape = 's32[1]{0}', space=sflag, size = 0x4, scoped, tag = 'scoped memory for tpu_custom_call.1']
    #allocation4 [shape = 'u8[16384]{0}', space=vmem, size = 0x4000, scoped, tag = 'input window, operand 1, single buffered']
    #allocation5 [shape = 's32[1]{0}', space=sflag, size = 0x4, scoped, tag = 'scoped memory for tpu_custom_call.1']
    %8 = vsyncpa [#allocation3], 0
    %9 = vsyncpa [#allocation5], 0
    // Predicated region
    $region2: #{tpu_custom_call.1} parent=1 // pred_check
      _
    $region3: #{tpu_custom_call.1} parent=1 // pred_check_branch
      %11 = sbr.rel (0) target = $region5
    $region4: #{tpu_custom_call.1} parent=1 // pred_region
      %s13 = ssub.s32 128, 128
      %14 = vsyncadd [#allocation3], %s13
      %s16 = sshll.u32 [#allocation2], 4
      %s17 = int_to_ptr.vmem [resolvable:$true] %s16
      %19 = dma.hbm_to_vmem [thread:$0]  %s0, 128, %s17, [#allocation3]
    $region5: #{tpu_custom_call.1} parent=1 // pred_fallthru
      _
    // Predicated region
    $region6: #{tpu_custom_call.1} parent=1 // pred_check
      _
    $region7: #{tpu_custom_call.1} parent=1 // pred_check_branch
      %21 = sbr.rel (0) target = $region9
    $region8: #{tpu_custom_call.1} parent=1 // pred_region
      %s23 = ssub.s32 512, 512
      %24 = vsyncadd [#allocation5], %s23
      %s25 = sshll.u32 [#allocation4], 4
      %s26 = int_to_ptr.vmem [resolvable:$true] %s25
      %31 = dma.hbm_to_vmem [thread:$0]  %s1, 512, %s26, [#allocation5], 128, 128, 8
    $region9: #{tpu_custom_call.1} parent=1 // pred_fallthru
      _
    // Predicated region
    $region10: #{tpu_custom_call.1} parent=1 // pred_check
      _
    $region11: #{tpu_custom_call.1} parent=1 // pred_check_branch
      %33 = sbr.rel (0) target = $region13
    $region12: #{tpu_custom_call.1} parent=1 // pred_region
      _
    $region13: #{tpu_custom_call.1} parent=1 // pred_fallthru
      _
    // Predicated region
    $region14: #{tpu_custom_call.1} parent=1 // pred_check
      _
    $region15: #{tpu_custom_call.1} parent=1 // pred_check_branch
      %35 = sbr.rel (0) target = $region17
    $region16: #{tpu_custom_call.1} parent=1 // pred_region
      %36 = dma.done [#allocation3], 128
    $region17: #{tpu_custom_call.1} parent=1 // pred_fallthru
      _
    // Predicated region
    $region18: #{tpu_custom_call.1} parent=1 // pred_check
      _
    $region19: #{tpu_custom_call.1} parent=1 // pred_check_branch
      %38 = sbr.rel (0) target = $region21
    $region20: #{tpu_custom_call.1} parent=1 // pred_region
      %39 = dma.done [#allocation5], 512
    $region21: #{tpu_custom_call.1} parent=1 // pred_fallthru
      _
    %v40 = vld [vmem:[#allocation2] sm:$0xff]
    %v41 = vld [vmem:[#allocation4] sm:$0xff]
    %v42 = vld [vmem:[#allocation4 + $0x8] sm:$0xff]
    %v43 = vld [vmem:[#allocation4 + $0x10] sm:$0xff]
    %v44 = vld [vmem:[#allocation4 + $0x18] sm:$0xff]
    %vm45 = vcmask 261120
    %v47 = vsel %vm45, %v40, 0
    %49 = vmatprep.subr.mxu0 0.0
    %50 = vmatpush1.msra.mxu0 %v41
    %51 = vmatprep.subr.mxu0 0.0
    %52 = vmatpush1.msra.mxu0 %v42
    %53 = vmatprep.subr.mxu0 0.0
    %54 = vmatpush1.msra.mxu0 %v43
    %55 = vmatprep.subr.mxu0 0.0
    %56 = vmatpush1.msra.mxu0 %v44
    %57 = vmatprep.subr.mxu0 0.0
    %58 = vmatpush1.msra.mxu0 0.0
    %59 = vmatprep.subr.mxu0 0.0
    %60 = vmatpush1.msra.mxu0 0.0
    %61 = vmatprep.subr.mxu0 0.0
    %62 = vmatpush1.msra.mxu0 0.0
    %63 = vmatprep.subr.mxu0 0.0
    %64 = vmatpush1.msra.mxu0 0.0
    %65 = vmatprep.subr.mxu0 0.0
    %66 = vmatpush1.msra.mxu0 0.0
    %67 = vmatprep.subr.mxu0 0.0
    %68 = vmatpush1.msra.mxu0 0.0
    %69 = vmatprep.subr.mxu0 0.0
    %70 = vmatpush1.msra.mxu0 0.0
    %71 = vmatprep.subr.mxu0 0.0
    %72 = vmatpush1.msra.mxu0 0.0
    %73 = vmatprep.subr.mxu0 0.0
    %74 = vmatpush1.msra.mxu0 0.0
    %75 = vmatprep.subr.mxu0 0.0
    %76 = vmatpush1.msra.mxu0 0.0
    %77 = vmatprep.subr.mxu0 0.0
    %78 = vmatpush1.msra.mxu0 0.0
    %79 = vmatprep.subr.mxu0 0.0
    %80 = vmatpush1.msra.mxu0 0.0
    %81 = vmatprep.subr.mxu0 0.0
    %82 = vmatpush1.msra.mxu0 0.0
    %83 = vmatprep.subr.mxu0 0.0
    %84 = vmatpush1.msra.mxu0 0.0
    %85 = vmatprep.subr.mxu0 0.0
    %86 = vmatpush1.msra.mxu0 0.0
    %87 = vmatprep.subr.mxu0 0.0
    %88 = vmatpush1.msra.mxu0 0.0
    %89 = vmatprep.subr.mxu0 0.0
    %90 = vmatpush1.msra.mxu0 0.0
    %91 = vmatprep.subr.mxu0 0.0
    %92 = vmatpush1.msra.mxu0 0.0
    %93 = vmatprep.subr.mxu0 0.0
    %94 = vmatpush1.msra.mxu0 0.0
    %95 = vmatprep.subr.mxu0 0.0
    %96 = vmatpush1.msra.mxu0 0.0
    %97 = vmatprep.subr.mxu0 0.0
    %98 = vmatpush1.msra.mxu0 0.0
    %99 = vmatprep.subr.mxu0 0.0
    %100 = vmatpush1.msra.mxu0 0.0
    %101 = vmatprep.subr.mxu0 0.0
    %102 = vmatpush1.msra.mxu0 0.0
    %103 = vmatprep.subr.mxu0 0.0
    %104 = vmatpush1.msra.mxu0 0.0
    %105 = vmatprep.subr.mxu0 0.0
    %106 = vmatpush1.msra.mxu0 0.0
    %107 = vmatprep.subr.mxu0 0.0
    %108 = vmatpush1.msra.mxu0 0.0
    %109 = vmatprep.subr.mxu0 0.0
    %110 = vmatpush1.msra.mxu0 0.0
    %111 = vmatprep.subr.mxu0 0.0
    %112 = vmatpush1.msra.mxu0 0.0
    %113 = vmatprep.mubr.f32.mxu0 0.0
    %114 = vmatmul.mubr.f32.gmra.mrb[0].mxu0 %v47
    %v115 = vpop.f32.mrb[0].mxu0
    %v116 = vadd.f32 0.0, %v115
    %v117 = vpop.f32.mrb[0].mxu0
    %118 = vdwg.mxu0
    %v119 = vmul.f32 %v116, %v116
    %120 = vadd.xlane.f32.xlu0 %v119
    %v121 = vpop.xlane.xlu0 %120
    %v122 = vmul.f32 %v121, 0.5
    %v123 = vld [vmem:[%s2] sm:$0x1]
    %v124 = vld [vmem:[%s2 + $0x1] sm:$0x1]
    %v125 = vlaneseq
    %v126 = vshrl.u32 %v125, 7
    %v127 = vsub.s32 0, %v126
    %v128 = vrot.slane %v123, %v127
    %v129 = vmul.f32 %v40, %v128
    %v130 = vlaneseq
    %v131 = vshrl.u32 %v130, 7
    %v132 = vsub.s32 0, %v131
    %v133 = vrot.slane %v124, %v132
    %v134 = vsub.f32 %v133, %v129
    %v135 = vmul.f32 %v40, %v134
    %v136 = vsel %vm45, %v135, 0.0
    %137 = vadd.xlane.f32.xlu0 %v136
    %v138 = vpop.xlane.xlu0 %137
    %v139 = vadd.f32 %v122, %v138
    %vm140 = vcmask 7168
    %141 = vst.msk [vmem:[%s3] sm:$0xff] %vm140, %v139
    // Predicated region
    $region22: #{tpu_custom_call.1} parent=1 // pred_check
      _
    $region23: #{tpu_custom_call.1} parent=1 // pred_check_branch
      %143 = sbr.rel (0) target = $region25
    $region24: #{tpu_custom_call.1} parent=1 // pred_region
      _
    $region25: #{tpu_custom_call.1} parent=1 // pred_fallthru
      _
    // Predicated region
    $region26: #{tpu_custom_call.1} parent=1 // pred_check
      _
    $region27: #{tpu_custom_call.1} parent=1 // pred_check_branch
      %145 = sbr.rel (0) target = $region29
    $region28: #{tpu_custom_call.1} parent=1 // pred_region
      _
    $region29: #{tpu_custom_call.1} parent=1 // pred_fallthru
      _
    %146 = vsyncpa [#allocation3], 1
    %147 = vsyncpa [#allocation5], 1

</llo_original>
